<compile_context>
chip_gen: v7x
topology: tpu7x:2x2x1
jax: 0.10.0
libtpu: 0.0.40
codegen_flags: <defaults>
</compile_context>

<pallas_src>
import math
import functools

import jax
import jax.numpy as jnp
from jax import lax
from jax.experimental import pallas as pl
from jax.experimental.pallas import tpu as pltpu


def _round_up(n, m):
    return ((n + m - 1) // m) * m


def _channel_decoder_kernel(x_ref, w1_ref, w2_ref, w3_ref, vec_ref, o_ref,
                            *, eps, d_model, s1p, s2p, dmp):
    # x_ref: [row_tile, in_features]; weights pre-transposed ([fan_in, fan_out])
    # and zero-padded to lane-dense widths.  vec_ref packs
    # [b1 | b2 | b3 | gamma | beta] along the lane axis (128-aligned offsets).
    x = x_ref[...]

    b1 = vec_ref[:, 0:s1p]
    b2 = vec_ref[:, s1p:s1p + s2p]
    b3 = vec_ref[:, s1p + s2p:s1p + s2p + dmp]
    gamma = vec_ref[:, s1p + s2p + dmp:s1p + s2p + 2 * dmp]
    beta = vec_ref[:, s1p + s2p + 2 * dmp:s1p + s2p + 3 * dmp]

    h = jnp.dot(x, w1_ref[...], preferred_element_type=jnp.float32) + b1
    h = jnp.dot(h, w2_ref[...], preferred_element_type=jnp.float32) + b2
    h = jnp.dot(h, w3_ref[...], preferred_element_type=jnp.float32) + b3

    # LayerNorm over the TRUE d_model columns (PyTorch semantics: biased
    # variance, eps inside sqrt).  Padded columns of h are exactly zero, so
    # the row sum over the padded slab equals the sum over the true columns.
    inv_d = 1.0 / d_model
    mu = jnp.sum(h, axis=-1, keepdims=True) * inv_d
    if dmp != d_model:
        col = lax.broadcasted_iota(jnp.int32, h.shape, 1)
        xc = jnp.where(col < d_model, h - mu, 0.0)
    else:
        xc = h - mu
    var = jnp.sum(xc * xc, axis=-1, keepdims=True) * inv_d
    inv = lax.rsqrt(var + eps)                       # EUP rsqrt (free slot)
    y = xc * inv * gamma + beta

    o_ref[...] = y.astype(o_ref.dtype)


def channel_decoder(x, params, *, eps=1e-5, row_tile=None):
    """x: [..., in_features] float32. params: pre-transposed weights + LN affine."""
    orig_shape = x.shape
    in_features = orig_shape[-1]
    n_rows = math.prod(orig_shape[:-1])

    w1, b1 = params["w1"], params["b1"]
    w2, b2 = params["w2"], params["b2"]
    w3, b3 = params["w3"], params["b3"]
    gamma, beta = params["gamma"], params["beta"]

    size1 = w1.shape[1]
    size2 = w2.shape[1]
    d_model = w3.shape[1]

    # ---- Lane-dense feature padding (multiples of 128). --------------------
    # In a real model these padded weights would be prepared once at load
    # time; here we build them in the wrapper for a self-contained demo.
    s1p = _round_up(size1, 128)
    s2p = _round_up(size2, 128)
    dmp = _round_up(d_model, 128)

    w1p = jnp.pad(w1, ((0, 0), (0, s1p - size1)))
    w2p = jnp.pad(w2, ((0, s1p - size1), (0, s2p - size2)))
    w3p = jnp.pad(w3, ((0, s2p - size2), (0, dmp - d_model)))
    vec = jnp.concatenate([
        jnp.pad(b1, ((0, 0), (0, s1p - size1))),
        jnp.pad(b2, ((0, 0), (0, s2p - size2))),
        jnp.pad(b3, ((0, 0), (0, dmp - d_model))),
        jnp.pad(gamma, ((0, 0), (0, dmp - d_model))),
        jnp.pad(beta, ((0, 0), (0, dmp - d_model))),
    ], axis=1)
    vec_width = vec.shape[1]

    # ---- Row tiling: big tiles, bounded, padded to a multiple. -------------
    if row_tile is None:
        row_tile = min(_round_up(max(n_rows, 1), 8), 256)
    row_tile = max(8, _round_up(row_tile, 8))
    n_rows_p = _round_up(n_rows, row_tile)

    x2d = x.reshape(n_rows, in_features)
    if n_rows_p != n_rows:
        x2d = jnp.pad(x2d, ((0, n_rows_p - n_rows), (0, 0)))

    grid = (n_rows_p // row_tile,)

    x_spec = pl.BlockSpec((row_tile, in_features), lambda i: (i, 0))
    w1_spec = pl.BlockSpec((in_features, s1p), lambda i: (0, 0))
    w2_spec = pl.BlockSpec((s1p, s2p), lambda i: (0, 0))
    w3_spec = pl.BlockSpec((s2p, dmp), lambda i: (0, 0))
    vec_spec = pl.BlockSpec((1, vec_width), lambda i: (0, 0))
    o_spec = pl.BlockSpec((row_tile, dmp), lambda i: (i, 0))

    kernel = functools.partial(_channel_decoder_kernel, eps=eps,
                               d_model=d_model, s1p=s1p, s2p=s2p, dmp=dmp)

    # ---- Explicit scoped-VMEM budget from the real footprint. --------------
    f32 = 4
    resident_bytes = f32 * (
        2 * row_tile * in_features                   # x block, double-buffered
        + 2 * row_tile * dmp                         # out block, double-buffered
        + 2 * (in_features * s1p + s1p * s2p + s2p * dmp + vec_width))  # weights
    vmem_limit = min(64 << 20, max(2 * resident_bytes + (4 << 20), 16 << 20))

    flops = (2 * n_rows_p * (in_features * s1p + s1p * s2p + s2p * dmp)
             + 10 * n_rows_p * dmp)
    bytes_accessed = f32 * (n_rows_p * in_features + n_rows_p * dmp
                            + in_features * s1p + s1p * s2p + s2p * dmp
                            + vec_width)
    cost = pl.CostEstimate(flops=flops, transcendentals=n_rows_p,
                           bytes_accessed=bytes_accessed)

    out2d = pl.pallas_call(
        kernel,
        out_shape=jax.ShapeDtypeStruct((n_rows_p, dmp), x.dtype),
        grid_spec=pltpu.PrefetchScalarGridSpec(
            num_scalar_prefetch=0,
            grid=grid,
            in_specs=[x_spec, w1_spec, w2_spec, w3_spec, vec_spec],
            out_specs=o_spec,
        ),
        compiler_params=pltpu.CompilerParams(
            dimension_semantics=("parallel",),
            vmem_limit_bytes=int(vmem_limit)),
        cost_estimate=cost,
    )(x2d, w1p, w2p, w3p, vec)

    out2d = out2d[:n_rows, :d_model]
    return out2d.reshape(*orig_shape[:-1], d_model)


def _reference(x, params, eps=1e-5):
    """Pure-JAX mirror of the PyTorch forward."""
    h = x @ params["w1"] + params["b1"]
    h = h @ params["w2"] + params["b2"]
    h = h @ params["w3"] + params["b3"]
    mu = jnp.mean(h, axis=-1, keepdims=True)
    var = jnp.mean((h - mu) ** 2, axis=-1, keepdims=True)
    return (h - mu) / jnp.sqrt(var + eps) * params["gamma"] + params["beta"]


if __name__ == "__main__":
    B, S = 2, 8
    in_features, size1, size2, d_model = 32, 64, 64, 32

    key0 = jax.random.PRNGKey(0)
    keys = jax.random.split(key0, 10)

    def lin_init(kw, kb, fan_in, fan_out):
        bound = 1.0 / math.sqrt(fan_in)
        w = jax.random.uniform(kw, (fan_in, fan_out), jnp.float32, -bound, bound)
        b = jax.random.uniform(kb, (1, fan_out), jnp.float32, -bound, bound)
        return w, b

    w1, b1 = lin_init(keys[0], keys[1], in_features, size1)
    w2, b2 = lin_init(keys[2], keys[3], size1, size2)
    w3, b3 = lin_init(keys[4], keys[5], size2, d_model)
    gamma = 1.0 + 0.1 * jax.random.normal(keys[6], (1, d_model), jnp.float32)
    beta = 0.1 * jax.random.normal(keys[7], (1, d_model), jnp.float32)

    params = {"w1": w1, "b1": b1, "w2": w2, "b2": b2, "w3": w3, "b3": b3,
              "gamma": gamma, "beta": beta}

    x = jax.random.normal(keys[8], (B, S, in_features), jnp.float32)

    out = channel_decoder(x, params)
    out = jax.block_until_ready(out)

    ref = _reference(x, params)
    assert out.shape == (B, S, d_model)
    assert jnp.allclose(out, ref, atol=1e-4, rtol=1e-4), "mismatch vs reference"

    print("KERNEL_OK")
</pallas_src>

<mosaic_0001>
module attributes {stable_mosaic.version = 11 : i64} {
  func.func @_channel_decoder_kernel(%arg0: i32, %arg1: memref<16x32xf32, #tpu.memory_space<vmem>>, %arg2: memref<32x128xf32, #tpu.memory_space<vmem>>, %arg3: memref<128x128xf32, #tpu.memory_space<vmem>>, %arg4: memref<128x128xf32, #tpu.memory_space<vmem>>, %arg5: memref<1x640xf32, #tpu.memory_space<vmem>>, %arg6: memref<16x128xf32, #tpu.memory_space<vmem>>) attributes {dimension_semantics = [#tpu.dimension_semantics<parallel>], iteration_bounds = array<i64: 1>, scalar_prefetch = 0 : i64, scratch_operands = 0 : i64, tpu.core_type = #tpu.core_type<tc>, window_params = [{transform_indices = @transform_0, window_bounds = array<i64: 16, 32>}, {pipeline_mode = #tpu.pipeline_mode<synchronous>, transform_indices = @transform_1, window_bounds = array<i64: 32, 128>}, {pipeline_mode = #tpu.pipeline_mode<synchronous>, transform_indices = @transform_2, window_bounds = array<i64: 128, 128>}, {pipeline_mode = #tpu.pipeline_mode<synchronous>, transform_indices = @transform_3, window_bounds = array<i64: 128, 128>}, {pipeline_mode = #tpu.pipeline_mode<synchronous>, transform_indices = @transform_4, window_bounds = array<i64: 1, 640>}, {transform_indices = @transform_5, window_bounds = array<i64: 16, 128>}]} {
    %c0 = arith.constant 0 : index
    %c0_0 = arith.constant 0 : index
    %0 = vector.load %arg1[%c0, %c0_0] : memref<16x32xf32, #tpu.memory_space<vmem>>, vector<16x32xf32>
    %c0_1 = arith.constant 0 : index
    %c0_2 = arith.constant 0 : index
    %1 = vector.load %arg5[%c0_1, %c0_2] : memref<1x640xf32, #tpu.memory_space<vmem>>, vector<1x128xf32>
    %c0_3 = arith.constant 0 : index
    %c128 = arith.constant 128 : index
    %2 = vector.load %arg5[%c0_3, %c128] : memref<1x640xf32, #tpu.memory_space<vmem>>, vector<1x128xf32>
    %c0_4 = arith.constant 0 : index
    %c256 = arith.constant 256 : index
    %3 = vector.load %arg5[%c0_4, %c256] : memref<1x640xf32, #tpu.memory_space<vmem>>, vector<1x128xf32>
    %c0_5 = arith.constant 0 : index
    %c384 = arith.constant 384 : index
    %4 = vector.load %arg5[%c0_5, %c384] : memref<1x640xf32, #tpu.memory_space<vmem>>, vector<1x128xf32>
    %c0_6 = arith.constant 0 : index
    %c512 = arith.constant 512 : index
    %5 = vector.load %arg5[%c0_6, %c512] : memref<1x640xf32, #tpu.memory_space<vmem>>, vector<1x128xf32>
    %c0_7 = arith.constant 0 : index
    %c0_8 = arith.constant 0 : index
    %6 = vector.load %arg2[%c0_7, %c0_8] : memref<32x128xf32, #tpu.memory_space<vmem>>, vector<32x128xf32>
    %cst = arith.constant dense<0.000000e+00> : vector<16x128xf32>
    %7 = tpu.matmul %0, %6, %cst {dimension_numbers = #tpu.dot_dimension_numbers<[1], [0], [0], [1], [0, 0, 1, 1], [], []>} : vector<16x32xf32>, vector<32x128xf32>, vector<16x128xf32> -> vector<16x128xf32>
    %8 = vector.broadcast %1 : vector<1x128xf32> to vector<16x128xf32>
    %9 = arith.addf %7, %8 : vector<16x128xf32>
    %c0_9 = arith.constant 0 : index
    %c0_10 = arith.constant 0 : index
    %10 = vector.load %arg3[%c0_9, %c0_10] : memref<128x128xf32, #tpu.memory_space<vmem>>, vector<128x128xf32>
    %cst_11 = arith.constant dense<0.000000e+00> : vector<16x128xf32>
    %11 = tpu.matmul %9, %10, %cst_11 {dimension_numbers = #tpu.dot_dimension_numbers<[1], [0], [0], [1], [0, 0, 1, 1], [], []>} : vector<16x128xf32>, vector<128x128xf32>, vector<16x128xf32> -> vector<16x128xf32>
    %12 = vector.broadcast %2 : vector<1x128xf32> to vector<16x128xf32>
    %13 = arith.addf %11, %12 : vector<16x128xf32>
    %c0_12 = arith.constant 0 : index
    %c0_13 = arith.constant 0 : index
    %14 = vector.load %arg4[%c0_12, %c0_13] : memref<128x128xf32, #tpu.memory_space<vmem>>, vector<128x128xf32>
    %cst_14 = arith.constant dense<0.000000e+00> : vector<16x128xf32>
    %15 = tpu.matmul %13, %14, %cst_14 {dimension_numbers = #tpu.dot_dimension_numbers<[1], [0], [0], [1], [0, 0, 1, 1], [], []>} : vector<16x128xf32>, vector<128x128xf32>, vector<16x128xf32> -> vector<16x128xf32>
    %16 = vector.broadcast %3 : vector<1x128xf32> to vector<16x128xf32>
    %17 = arith.addf %15, %16 : vector<16x128xf32>
    %cst_15 = arith.constant dense<0.000000e+00> : vector<16xf32>
    %18 = vector.multi_reduction <add>, %17, %cst_15 [1] : vector<16x128xf32> to vector<16xf32>
    %19 = vector.shape_cast %18 : vector<16xf32> to vector<16x1xf32>
    %cst_16 = arith.constant 3.125000e-02 : f32
    %20 = vector.broadcast %cst_16 : f32 to vector<16x1xf32>
    %21 = arith.mulf %19, %20 : vector<16x1xf32>
    %22 = tpu.iota {dimensions = array<i32: 1>} : vector<16x128xi32>
    %c32_i32 = arith.constant 32 : i32
    %23 = vector.broadcast %c32_i32 : i32 to vector<16x128xi32>
    %24 = arith.cmpi slt, %22, %23 : vector<16x128xi32>
    %25 = vector.broadcast %21 : vector<16x1xf32> to vector<16x128xf32>
    %26 = arith.subf %17, %25 : vector<16x128xf32>
    %cst_17 = arith.constant 0.000000e+00 : f32
    %27 = vector.broadcast %cst_17 : f32 to vector<16x128xf32>
    %28 = arith.select %24, %26, %27 : vector<16x128xi1>, vector<16x128xf32>
    %29 = arith.mulf %28, %28 : vector<16x128xf32>
    %cst_18 = arith.constant dense<0.000000e+00> : vector<16xf32>
    %30 = vector.multi_reduction <add>, %29, %cst_18 [1] : vector<16x128xf32> to vector<16xf32>
    %31 = vector.shape_cast %30 : vector<16xf32> to vector<16x1xf32>
    %cst_19 = arith.constant 3.125000e-02 : f32
    %32 = vector.broadcast %cst_19 : f32 to vector<16x1xf32>
    %33 = arith.mulf %31, %32 : vector<16x1xf32>
    %cst_20 = arith.constant 9.99999974E-6 : f32
    %34 = vector.broadcast %cst_20 : f32 to vector<16x1xf32>
    %35 = arith.addf %33, %34 : vector<16x1xf32>
    %36 = math.rsqrt %35 : vector<16x1xf32>
    %37 = vector.broadcast %36 : vector<16x1xf32> to vector<16x128xf32>
    %38 = arith.mulf %28, %37 : vector<16x128xf32>
    %39 = vector.broadcast %4 : vector<1x128xf32> to vector<16x128xf32>
    %40 = arith.mulf %38, %39 : vector<16x128xf32>
    %41 = vector.broadcast %5 : vector<1x128xf32> to vector<16x128xf32>
    %42 = arith.addf %40, %41 : vector<16x128xf32>
    %c0_21 = arith.constant 0 : index
    %c0_22 = arith.constant 0 : index
    %43 = vector.load %arg6[%c0_21, %c0_22] : memref<16x128xf32, #tpu.memory_space<vmem>>, vector<16x128xf32>
    tpu.vector_store %arg6[%c0_21, %c0_22], %42 {strides = array<i32>} : memref<16x128xf32, #tpu.memory_space<vmem>>, vector<16x128xf32>,
    return
  }
  func.func @transform_0(%arg0: i32) -> (i32, i32) {
    %c0_i32 = arith.constant 0 : i32
    %c0_i32_0 = arith.constant 0 : i32
    return %arg0, %c0_i32 : i32, i32
  }
  func.func @transform_1(%arg0: i32) -> (i32, i32) {
    %c0_i32 = arith.constant 0 : i32
    %c0_i32_0 = arith.constant 0 : i32
    %c0_i32_1 = arith.constant 0 : i32
    return %c0_i32, %c0_i32_0 : i32, i32
  }
  func.func @transform_2(%arg0: i32) -> (i32, i32) {
    %c0_i32 = arith.constant 0 : i32
    %c0_i32_0 = arith.constant 0 : i32
    %c0_i32_1 = arith.constant 0 : i32
    return %c0_i32, %c0_i32_0 : i32, i32
  }
  func.func @transform_3(%arg0: i32) -> (i32, i32) {
    %c0_i32 = arith.constant 0 : i32
    %c0_i32_0 = arith.constant 0 : i32
    %c0_i32_1 = arith.constant 0 : i32
    return %c0_i32, %c0_i32_0 : i32, i32
  }
  func.func @transform_4(%arg0: i32) -> (i32, i32) {
    %c0_i32 = arith.constant 0 : i32
    %c0_i32_0 = arith.constant 0 : i32
    %c0_i32_1 = arith.constant 0 : i32
    return %c0_i32, %c0_i32_0 : i32, i32
  }
  func.func @transform_5(%arg0: i32) -> (i32, i32) {
    %c0_i32 = arith.constant 0 : i32
    %c0_i32_0 = arith.constant 0 : i32
    return %arg0, %c0_i32 : i32, i32
  }
}

</mosaic_0001>

<llo_original>
// kernel: tpu_custom_call.1
$region0: #{tpu_custom_call.1}
  #allocation0 [shape = 'u32[]', space=smem, size = 0x4, offset = 0x4, fixed_abs, tag = 'smem constant byte address 0x4 - core index']
  #allocation1 [shape = 'u32[144,128]{1,0:T(1,128)}', space=vmem, size = 0x12000, scoped, tag = 'internal scratch']
  %s0 = inlined_call_operand.hbm [shape: f32[16,32], index: 0, kind: input, shape index: {}]
  %s1 = inlined_call_operand.hbm [shape: f32[32,128], index: 1, kind: input, shape index: {}]
  %s2 = inlined_call_operand.hbm [shape: f32[128,128], index: 2, kind: input, shape index: {}]
  %s3 = inlined_call_operand.hbm [shape: f32[128,128], index: 3, kind: input, shape index: {}]
  %s4 = inlined_call_operand.vmem [shape: f32[1,640], index: 4, kind: input, shape index: {}]
  %s5 = inlined_call_operand.hbm [shape: f32[16,128], index: 5, kind: output, shape index: {}]
  %s6 = sld [smem:[#allocation0]]
  $region46: #{tpu_custom_call.1} parent=0
    _
  %s8 = ssub.s32 1, %s6
  %s9 = scalar_select 0, %s8, %s6
  $region1: #{tpu_custom_call.1} parent=0
    #allocation2 [shape = 'u8[8192]{0}', space=vmem, size = 0x2000, scoped, tag = 'input window, operand 0, single buffered']
    #allocation3 [shape = 's32[1]{0}', space=sflag, size = 0x4, scoped, tag = 'scoped memory for tpu_custom_call.1']
    #allocation4 [shape = 's32[1]{0}', space=sflag, size = 0x4, scoped, tag = 'scoped memory for tpu_custom_call.1']
    #allocation5 [shape = 'u8[16384]{0}', space=vmem, size = 0x4000, scoped, tag = 'input window, operand 1, single buffered']
    #allocation6 [shape = 's32[1]{0}', space=sflag, size = 0x4, scoped, tag = 'scoped memory for tpu_custom_call.1']
    #allocation7 [shape = 'u8[65536]{0}', space=vmem, size = 0x10000, scoped, tag = 'input window, operand 2, single buffered']
    #allocation8 [shape = 'u8[65536]{0}', space=vmem, size = 0x10000, scoped, tag = 'input window, operand 3, single buffered']
    #allocation9 [shape = 's32[1]{0}', space=sflag, size = 0x4, scoped, tag = 'scoped memory for tpu_custom_call.1']
    #allocation10 [shape = 'u8[8192]{0}', space=vmem, size = 0x2000, scoped, tag = 'output window, operand 0, single buffered']
    %10 = vsyncpa [#allocation3], 0
    %11 = vsyncpa [#allocation6], 0
    %12 = vsyncpa [#allocation9], 0
    %13 = vsyncpa [#allocation4], 0
    // Predicated region
    $region2: #{tpu_custom_call.1} parent=1 // pred_check
      _
    $region3: #{tpu_custom_call.1} parent=1 // pred_check_branch
      %15 = sbr.rel (0) target = $region5
    $region4: #{tpu_custom_call.1} parent=1 // pred_region
      %s17 = ssub.s32 256, 256
      %18 = vsyncadd [#allocation3], %s17
      %s19 = sshll.u32 [#allocation2], 4
      %s20 = int_to_ptr.vmem [resolvable:$true] %s19
      %25 = dma.hbm_to_vmem [thread:$0]  %s0, 256, %s20, [#allocation3], 128, 128, 8
    $region5: #{tpu_custom_call.1} parent=1 // pred_fallthru
      _
    // Predicated region
    $region6: #{tpu_custom_call.1} parent=1 // pred_check
      _
    $region7: #{tpu_custom_call.1} parent=1 // pred_check_branch
      %27 = sbr.rel (0) target = $region9
    $region8: #{tpu_custom_call.1} parent=1 // pred_region
      %s29 = ssub.s32 512, 512
      %30 = vsyncadd [#allocation6], %s29
      %s31 = sshll.u32 [#allocation5], 4
      %s32 = int_to_ptr.vmem [resolvable:$true] %s31
      %37 = dma.hbm_to_vmem [thread:$0]  %s1, 512, %s32, [#allocation6], 128, 128, 8
    $region9: #{tpu_custom_call.1} parent=1 // pred_fallthru
      _
    // Predicated region
    $region10: #{tpu_custom_call.1} parent=1 // pred_check
      _
    $region11: #{tpu_custom_call.1} parent=1 // pred_check_branch
      %39 = sbr.rel (0) target = $region13
    $region12: #{tpu_custom_call.1} parent=1 // pred_region
      %s41 = ssub.s32 2048, 2048
      %42 = vsyncadd [#allocation6], %s41
      %s43 = sshll.u32 [#allocation7], 4
      %s44 = int_to_ptr.vmem [resolvable:$true] %s43
      %49 = dma.hbm_to_vmem [thread:$0]  %s2, 2048, %s44, [#allocation6], 128, 128, 8
    $region13: #{tpu_custom_call.1} parent=1 // pred_fallthru
      _
    // Predicated region
    $region14: #{tpu_custom_call.1} parent=1 // pred_check
      _
    $region15: #{tpu_custom_call.1} parent=1 // pred_check_branch
      %51 = sbr.rel (0) target = $region17
    $region16: #{tpu_custom_call.1} parent=1 // pred_region
      %s53 = ssub.s32 2048, 2048
      %54 = vsyncadd [#allocation9], %s53
      %s55 = sshll.u32 [#allocation8], 4
      %s56 = int_to_ptr.vmem [resolvable:$true] %s55
      %61 = dma.hbm_to_vmem [thread:$0]  %s3, 2048, %s56, [#allocation9], 128, 128, 8
    $region17: #{tpu_custom_call.1} parent=1 // pred_fallthru
      _
    // Predicated region
    $region18: #{tpu_custom_call.1} parent=1 // pred_check
      _
    $region19: #{tpu_custom_call.1} parent=1 // pred_check_branch
      %63 = sbr.rel (0) target = $region21
    $region20: #{tpu_custom_call.1} parent=1 // pred_region
      _
    $region21: #{tpu_custom_call.1} parent=1 // pred_fallthru
      _
    // Predicated region
    $region22: #{tpu_custom_call.1} parent=1 // pred_check
      _
    $region23: #{tpu_custom_call.1} parent=1 // pred_check_branch
      %65 = sbr.rel (0) target = $region25
    $region24: #{tpu_custom_call.1} parent=1 // pred_region
      %66 = dma.done [#allocation3], 256
    $region25: #{tpu_custom_call.1} parent=1 // pred_fallthru
      _
    // Predicated region
    $region26: #{tpu_custom_call.1} parent=1 // pred_check
      _
    $region27: #{tpu_custom_call.1} parent=1 // pred_check_branch
      %68 = sbr.rel (0) target = $region29
    $region28: #{tpu_custom_call.1} parent=1 // pred_region
      %69 = dma.done [#allocation6], 512
    $region29: #{tpu_custom_call.1} parent=1 // pred_fallthru
      _
    // Predicated region
    $region30: #{tpu_custom_call.1} parent=1 // pred_check
      _
    $region31: #{tpu_custom_call.1} parent=1 // pred_check_branch
      %71 = sbr.rel (0) target = $region33
    $region32: #{tpu_custom_call.1} parent=1 // pred_region
      %72 = dma.done [#allocation6], 2048
    $region33: #{tpu_custom_call.1} parent=1 // pred_fallthru
      _
    // Predicated region
    $region34: #{tpu_custom_call.1} parent=1 // pred_check
      _
    $region35: #{tpu_custom_call.1} parent=1 // pred_check_branch
      %74 = sbr.rel (0) target = $region37
    $region36: #{tpu_custom_call.1} parent=1 // pred_region
      %75 = dma.done [#allocation9], 2048
    $region37: #{tpu_custom_call.1} parent=1 // pred_fallthru
      _
    %v76 = vld [vmem:[#allocation2] sm:$0xff]
    %v77 = vld [vmem:[#allocation2 + $0x8] sm:$0xff]
    %v78 = vld [vmem:[%s4] sm:$0x1]
    %v79 = vld [vmem:[%s4 + $0x1] sm:$0x1]
    %v80 = vld [vmem:[%s4 + $0x2] sm:$0x1]
    %v81 = vld [vmem:[%s4 + $0x3] sm:$0x1]
    %v82 = vld [vmem:[%s4 + $0x4] sm:$0x1]
    %v83 = vld [vmem:[#allocation5] sm:$0xff]
    %v84 = vld [vmem:[#allocation5 + $0x8] sm:$0xff]
    %v85 = vld [vmem:[#allocation5 + $0x10] sm:$0xff]
    %v86 = vld [vmem:[#allocation5 + $0x18] sm:$0xff]
    %v88 = vlaneseq
    %v89 = vshrl.u32 %v88, 7
    %v90 = vsub.s32 0, %v89
    %v91 = vrot.slane %v78, %v90
    %vm93 = vcmask 261120
    %v95 = vsel %vm93, %v76, 0
    %v98 = vsel %vm93, %v77, 0
    %100 = vmatprep.subr.mxu0 0.0
    %101 = vmatpush1.msra.mxu0 %v83
    %102 = vmatprep.subr.mxu0 0.0
    %103 = vmatpush1.msra.mxu0 %v84
    %104 = vmatprep.subr.mxu0 0.0
    %105 = vmatpush1.msra.mxu0 %v85
    %106 = vmatprep.subr.mxu0 0.0
    %107 = vmatpush1.msra.mxu0 %v86
    %108 = vmatprep.subr.mxu0 0.0
    %109 = vmatpush1.msra.mxu0 0.0
    %110 = vmatprep.subr.mxu0 0.0
    %111 = vmatpush1.msra.mxu0 0.0
    %112 = vmatprep.subr.mxu0 0.0
    %113 = vmatpush1.msra.mxu0 0.0
    %114 = vmatprep.subr.mxu0 0.0
    %115 = vmatpush1.msra.mxu0 0.0
    %116 = vmatprep.subr.mxu0 0.0
    %117 = vmatpush1.msra.mxu0 0.0
    %118 = vmatprep.subr.mxu0 0.0
    %119 = vmatpush1.msra.mxu0 0.0
    %120 = vmatprep.subr.mxu0 0.0
    %121 = vmatpush1.msra.mxu0 0.0
    %122 = vmatprep.subr.mxu0 0.0
    %123 = vmatpush1.msra.mxu0 0.0
    %124 = vmatprep.subr.mxu0 0.0
    %125 = vmatpush1.msra.mxu0 0.0
    %126 = vmatprep.subr.mxu0 0.0
    %127 = vmatpush1.msra.mxu0 0.0
    %128 = vmatprep.subr.mxu0 0.0
    %129 = vmatpush1.msra.mxu0 0.0
    %130 = vmatprep.subr.mxu0 0.0
    %131 = vmatpush1.msra.mxu0 0.0
    %132 = vmatprep.subr.mxu0 0.0
    %133 = vmatpush1.msra.mxu0 0.0
    %134 = vmatprep.subr.mxu0 0.0
    %135 = vmatpush1.msra.mxu0 0.0
    %136 = vmatprep.subr.mxu0 0.0
    %137 = vmatpush1.msra.mxu0 0.0
    %138 = vmatprep.subr.mxu0 0.0
    %139 = vmatpush1.msra.mxu0 0.0
    %140 = vmatprep.subr.mxu0 0.0
    %141 = vmatpush1.msra.mxu0 0.0
    %142 = vmatprep.subr.mxu0 0.0
    %143 = vmatpush1.msra.mxu0 0.0
    %144 = vmatprep.subr.mxu0 0.0
    %145 = vmatpush1.msra.mxu0 0.0
    %146 = vmatprep.subr.mxu0 0.0
    %147 = vmatpush1.msra.mxu0 0.0
    %148 = vmatprep.subr.mxu0 0.0
    %149 = vmatpush1.msra.mxu0 0.0
    %150 = vmatprep.subr.mxu0 0.0
    %151 = vmatpush1.msra.mxu0 0.0
    %152 = vmatprep.subr.mxu0 0.0
    %153 = vmatpush1.msra.mxu0 0.0
    %154 = vmatprep.subr.mxu0 0.0
    %155 = vmatpush1.msra.mxu0 0.0
    %156 = vmatprep.subr.mxu0 0.0
    %157 = vmatpush1.msra.mxu0 0.0
    %158 = vmatprep.subr.mxu0 0.0
    %159 = vmatpush1.msra.mxu0 0.0
    %160 = vmatprep.subr.mxu0 0.0
    %161 = vmatpush1.msra.mxu0 0.0
    %162 = vmatprep.subr.mxu0 0.0
    %163 = vmatpush1.msra.mxu0 0.0
    %164 = vmatprep.mubr.f32.mxu0 0.0
    %165 = vmatmul.mubr.f32.gmra.mrb[0].mxu0 %v95
    %v166 = vpop.f32.mrb[0].mxu0
    %v167 = vadd.f32 %v91, %v166
    %v168 = vpop.f32.mrb[0].mxu0
    %169 = vmatprep.mubr.f32.mxu0 0.0
    %170 = vmatmul.mubr.f32.gmra.mrb[0].mxu0 %v98
    %v171 = vpop.f32.mrb[0].mxu0
    %v172 = vadd.f32 %v91, %v171
    %v173 = vpop.f32.mrb[0].mxu0
    %174 = vdwg.mxu0
    %v175 = vld [vmem:[#allocation7] sm:$0xff]
    %v176 = vld [vmem:[#allocation7 + $0x8] sm:$0xff]
    %v177 = vld [vmem:[#allocation7 + $0x10] sm:$0xff]
    %v178 = vld [vmem:[#allocation7 + $0x18] sm:$0xff]
    %v179 = vld [vmem:[#allocation7 + $0x20] sm:$0xff]
    %v180 = vld [vmem:[#allocation7 + $0x28] sm:$0xff]
    %v181 = vld [vmem:[#allocation7 + $0x30] sm:$0xff]
    %v182 = vld [vmem:[#allocation7 + $0x38] sm:$0xff]
    %v183 = vld [vmem:[#allocation7 + $0x40] sm:$0xff]
    %v184 = vld [vmem:[#allocation7 + $0x48] sm:$0xff]
    %v185 = vld [vmem:[#allocation7 + $0x50] sm:$0xff]
    %v186 = vld [vmem:[#allocation7 + $0x58] sm:$0xff]
    %v187 = vld [vmem:[#allocation7 + $0x60] sm:$0xff]
    %v188 = vld [vmem:[#allocation7 + $0x68] sm:$0xff]
    %v189 = vld [vmem:[#allocation7 + $0x70] sm:$0xff]
    %v190 = vld [vmem:[#allocation7 + $0x78] sm:$0xff]
    %v192 = vlaneseq
    %v193 = vshrl.u32 %v192, 7
    %v194 = vsub.s32 0, %v193
    %v195 = vrot.slane %v79, %v194
    %197 = vmatprep.subr.mxu0 0.0
    %198 = vmatpush1.msra.mxu0 %v175
    %199 = vmatprep.subr.mxu0 0.0
    %200 = vmatpush1.msra.mxu0 %v176
    %201 = vmatprep.subr.mxu0 0.0
    %202 = vmatpush1.msra.mxu0 %v177
    %203 = vmatprep.subr.mxu0 0.0
    %204 = vmatpush1.msra.mxu0 %v178
    %205 = vmatprep.subr.mxu0 0.0
    %206 = vmatpush1.msra.mxu0 %v179
    %207 = vmatprep.subr.mxu0 0.0
    %208 = vmatpush1.msra.mxu0 %v180
    %209 = vmatprep.subr.mxu0 0.0
    %210 = vmatpush1.msra.mxu0 %v181
    %211 = vmatprep.subr.mxu0 0.0
    %212 = vmatpush1.msra.mxu0 %v182
    %213 = vmatprep.subr.mxu0 0.0
    %214 = vmatpush1.msra.mxu0 %v183
    %215 = vmatprep.subr.mxu0 0.0
    %216 = vmatpush1.msra.mxu0 %v184
    %217 = vmatprep.subr.mxu0 0.0
    %218 = vmatpush1.msra.mxu0 %v185
    %219 = vmatprep.subr.mxu0 0.0
    %220 = vmatpush1.msra.mxu0 %v186
    %221 = vmatprep.subr.mxu0 0.0
    %222 = vmatpush1.msra.mxu0 %v187
    %223 = vmatprep.subr.mxu0 0.0
    %224 = vmatpush1.msra.mxu0 %v188
    %225 = vmatprep.subr.mxu0 0.0
    %226 = vmatpush1.msra.mxu0 %v189
    %227 = vmatprep.subr.mxu0 0.0
    %228 = vmatpush1.msra.mxu0 %v190
    %229 = vmatprep.subr.mxu0 0.0
    %230 = vmatpush1.msra.mxu0 0.0
    %231 = vmatprep.subr.mxu0 0.0
    %232 = vmatpush1.msra.mxu0 0.0
    %233 = vmatprep.subr.mxu0 0.0
    %234 = vmatpush1.msra.mxu0 0.0
    %235 = vmatprep.subr.mxu0 0.0
    %236 = vmatpush1.msra.mxu0 0.0
    %237 = vmatprep.subr.mxu0 0.0
    %238 = vmatpush1.msra.mxu0 0.0
    %239 = vmatprep.subr.mxu0 0.0
    %240 = vmatpush1.msra.mxu0 0.0
    %241 = vmatprep.subr.mxu0 0.0
    %242 = vmatpush1.msra.mxu0 0.0
    %243 = vmatprep.subr.mxu0 0.0
    %244 = vmatpush1.msra.mxu0 0.0
    %245 = vmatprep.subr.mxu0 0.0
    %246 = vmatpush1.msra.mxu0 0.0
    %247 = vmatprep.subr.mxu0 0.0
    %248 = vmatpush1.msra.mxu0 0.0
    %249 = vmatprep.subr.mxu0 0.0
    %250 = vmatpush1.msra.mxu0 0.0
    %251 = vmatprep.subr.mxu0 0.0
    %252 = vmatpush1.msra.mxu0 0.0
    %253 = vmatprep.subr.mxu0 0.0
    %254 = vmatpush1.msra.mxu0 0.0
    %255 = vmatprep.subr.mxu0 0.0
    %256 = vmatpush1.msra.mxu0 0.0
    %257 = vmatprep.subr.mxu0 0.0
    %258 = vmatpush1.msra.mxu0 0.0
    %259 = vmatprep.subr.mxu0 0.0
    %260 = vmatpush1.msra.mxu0 0.0
    %261 = vmatprep.mubr.f32.mxu0 0.0
    %262 = vmatmul.mubr.f32.gmra.mrb[0].mxu0 %v167
    %v263 = vpop.f32.mrb[0].mxu0
    %v264 = vadd.f32 %v195, %v263
    %v265 = vpop.f32.mrb[0].mxu0
    %266 = vmatprep.mubr.f32.mxu0 0.0
    %267 = vmatmul.mubr.f32.gmra.mrb[0].mxu0 %v172
    %v268 = vpop.f32.mrb[0].mxu0
    %v269 = vadd.f32 %v195, %v268
    %v270 = vpop.f32.mrb[0].mxu0
    %271 = vdwg.mxu0
    %v272 = vld [vmem:[#allocation8] sm:$0xff]
    %v273 = vld [vmem:[#allocation8 + $0x8] sm:$0xff]
    %v274 = vld [vmem:[#allocation8 + $0x10] sm:$0xff]
    %v275 = vld [vmem:[#allocation8 + $0x18] sm:$0xff]
    %v276 = vld [vmem:[#allocation8 + $0x20] sm:$0xff]
    %v277 = vld [vmem:[#allocation8 + $0x28] sm:$0xff]
    %v278 = vld [vmem:[#allocation8 + $0x30] sm:$0xff]
    %v279 = vld [vmem:[#allocation8 + $0x38] sm:$0xff]
    %v280 = vld [vmem:[#allocation8 + $0x40] sm:$0xff]
    %v281 = vld [vmem:[#allocation8 + $0x48] sm:$0xff]
    %v282 = vld [vmem:[#allocation8 + $0x50] sm:$0xff]
    %v283 = vld [vmem:[#allocation8 + $0x58] sm:$0xff]
    %v284 = vld [vmem:[#allocation8 + $0x60] sm:$0xff]
    %v285 = vld [vmem:[#allocation8 + $0x68] sm:$0xff]
    %v286 = vld [vmem:[#allocation8 + $0x70] sm:$0xff]
    %v287 = vld [vmem:[#allocation8 + $0x78] sm:$0xff]
    %v289 = vlaneseq
    %v290 = vshrl.u32 %v289, 7
    %v291 = vsub.s32 0, %v290
    %v292 = vrot.slane %v80, %v291
    %294 = vmatprep.subr.mxu0 0.0
    %295 = vmatpush1.msra.mxu0 %v272
    %296 = vmatprep.subr.mxu0 0.0
    %297 = vmatpush1.msra.mxu0 %v273
    %298 = vmatprep.subr.mxu0 0.0
    %299 = vmatpush1.msra.mxu0 %v274
    %300 = vmatprep.subr.mxu0 0.0
    %301 = vmatpush1.msra.mxu0 %v275
    %302 = vmatprep.subr.mxu0 0.0
    %303 = vmatpush1.msra.mxu0 %v276
    %304 = vmatprep.subr.mxu0 0.0
    %305 = vmatpush1.msra.mxu0 %v277
    %306 = vmatprep.subr.mxu0 0.0
    %307 = vmatpush1.msra.mxu0 %v278
    %308 = vmatprep.subr.mxu0 0.0
    %309 = vmatpush1.msra.mxu0 %v279
    %310 = vmatprep.subr.mxu0 0.0
    %311 = vmatpush1.msra.mxu0 %v280
    %312 = vmatprep.subr.mxu0 0.0
    %313 = vmatpush1.msra.mxu0 %v281
    %314 = vmatprep.subr.mxu0 0.0
    %315 = vmatpush1.msra.mxu0 %v282
    %316 = vmatprep.subr.mxu0 0.0
    %317 = vmatpush1.msra.mxu0 %v283
    %318 = vmatprep.subr.mxu0 0.0
    %319 = vmatpush1.msra.mxu0 %v284
    %320 = vmatprep.subr.mxu0 0.0
    %321 = vmatpush1.msra.mxu0 %v285
    %322 = vmatprep.subr.mxu0 0.0
    %323 = vmatpush1.msra.mxu0 %v286
    %324 = vmatprep.subr.mxu0 0.0
    %325 = vmatpush1.msra.mxu0 %v287
    %326 = vmatprep.subr.mxu0 0.0
    %327 = vmatpush1.msra.mxu0 0.0
    %328 = vmatprep.subr.mxu0 0.0
    %329 = vmatpush1.msra.mxu0 0.0
    %330 = vmatprep.subr.mxu0 0.0
    %331 = vmatpush1.msra.mxu0 0.0
    %332 = vmatprep.subr.mxu0 0.0
    %333 = vmatpush1.msra.mxu0 0.0
    %334 = vmatprep.subr.mxu0 0.0
    %335 = vmatpush1.msra.mxu0 0.0
    %336 = vmatprep.subr.mxu0 0.0
    %337 = vmatpush1.msra.mxu0 0.0
    %338 = vmatprep.subr.mxu0 0.0
    %339 = vmatpush1.msra.mxu0 0.0
    %340 = vmatprep.subr.mxu0 0.0
    %341 = vmatpush1.msra.mxu0 0.0
    %342 = vmatprep.subr.mxu0 0.0
    %343 = vmatpush1.msra.mxu0 0.0
    %344 = vmatprep.subr.mxu0 0.0
    %345 = vmatpush1.msra.mxu0 0.0
    %346 = vmatprep.subr.mxu0 0.0
    %347 = vmatpush1.msra.mxu0 0.0
    %348 = vmatprep.subr.mxu0 0.0
    %349 = vmatpush1.msra.mxu0 0.0
    %350 = vmatprep.subr.mxu0 0.0
    %351 = vmatpush1.msra.mxu0 0.0
    %352 = vmatprep.subr.mxu0 0.0
    %353 = vmatpush1.msra.mxu0 0.0
    %354 = vmatprep.subr.mxu0 0.0
    %355 = vmatpush1.msra.mxu0 0.0
    %356 = vmatprep.subr.mxu0 0.0
    %357 = vmatpush1.msra.mxu0 0.0
    %358 = vmatprep.mubr.f32.mxu0 0.0
    %359 = vmatmul.mubr.f32.gmra.mrb[0].mxu0 %v264
    %v360 = vpop.f32.mrb[0].mxu0
    %v361 = vadd.f32 %v292, %v360
    %v362 = vpop.f32.mrb[0].mxu0
    %363 = vmatprep.mubr.f32.mxu0 0.0
    %364 = vmatmul.mubr.f32.gmra.mrb[0].mxu0 %v269
    %v365 = vpop.f32.mrb[0].mxu0
    %v366 = vadd.f32 %v292, %v365
    %v367 = vpop.f32.mrb[0].mxu0
    %368 = vdwg.mxu0
    %369 = vadd.xlane.f32.xlu0 %v361
    %v370 = vpop.xlane.xlu0 %369
    %371 = vadd.xlane.f32.xlu0 %v366
    %v372 = vpop.xlane.xlu0 %371
    %v373 = vmul.f32 %v370, 0.03125
    %v374 = vmul.f32 %v372, 0.03125
    %v375 = vlaneseq
    %v376 = vand.u32 %v375, 127
    %vm377 = vcmp.lt.s32.totalorder %v376, 32
    %v378 = vsub.f32 %v361, %v373
    %v379 = vsub.f32 %v366, %v374
    %v380 = vsel %vm377, %v378, 0.0
    %v381 = vsel %vm377, %v379, 0.0
    %v382 = vmul.f32 %v380, %v380
    %v383 = vmul.f32 %v381, %v381
    %384 = vadd.xlane.f32.xlu0 %v382
    %v385 = vpop.xlane.xlu0 %384
    %386 = vadd.xlane.f32.xlu0 %v383
    %v387 = vpop.xlane.xlu0 %386
    %v388 = vmul.f32 %v385, 0.03125
    %v389 = vmul.f32 %v387, 0.03125
    %v390 = vadd.f32 %v388, 1e-05
    %v391 = vadd.f32 %v389, 1e-05
    %v392 = vrsqrt.pop %v390
    %v393 = vrsqrt.pop %v391
    %v394 = vmul.f32 %v380, %v392
    %v395 = vmul.f32 %v381, %v393
    %v397 = vlaneseq
    %v398 = vshrl.u32 %v397, 7
    %v399 = vsub.s32 0, %v398
    %v400 = vrot.slane %v81, %v399
    %v402 = vmul.f32 %v394, %v400
    %v403 = vmul.f32 %v395, %v400
    %v405 = vlaneseq
    %v406 = vshrl.u32 %v405, 7
    %v407 = vsub.s32 0, %v406
    %v408 = vrot.slane %v82, %v407
    %v410 = vadd.f32 %v402, %v408
    %v411 = vadd.f32 %v403, %v408
    %412 = vst [vmem:[#allocation10] sm:$0xff] %v410
    %413 = vst [vmem:[#allocation10 + $0x8] sm:$0xff] %v411
    // Predicated region
    $region38: #{tpu_custom_call.1} parent=1 // pred_check
      _
    $region39: #{tpu_custom_call.1} parent=1 // pred_check_branch
      %415 = sbr.rel (0) target = $region41
    $region40: #{tpu_custom_call.1} parent=1 // pred_region
      %s417 = ssub.s32 256, 256
      %418 = vsyncadd [#allocation4], %s417
      %s419 = sshll.u32 [#allocation10], 4
      %s420 = int_to_ptr.vmem [resolvable:$true] %s419
      %425 = dma.vmem_to_hbm [thread:$0]  %s420, 256, %s5, [#allocation4], 128, 128, 8
    $region41: #{tpu_custom_call.1} parent=1 // pred_fallthru
      _
    // Predicated region
    $region42: #{tpu_custom_call.1} parent=1 // pred_check
      _
    $region43: #{tpu_custom_call.1} parent=1 // pred_check_branch
      %427 = sbr.rel (0) target = $region45
    $region44: #{tpu_custom_call.1} parent=1 // pred_region
      %428 = dma.done [#allocation4], 256
    $region45: #{tpu_custom_call.1} parent=1 // pred_fallthru
      _
    %429 = vsyncpa [#allocation3], 1
    %430 = vsyncpa [#allocation6], 1
    %431 = vsyncpa [#allocation9], 1
    %432 = vsyncpa [#allocation4], 1

</llo_original>
